<compile_context>
chip_gen: v5e
topology: v5e:2x2
jax: 0.10.0
libtpu: 0.0.40
codegen_flags: <defaults>
</compile_context>

<pallas_src>
import functools

import jax
import jax.numpy as jnp
from jax.experimental import pallas as pl
from jax.experimental.pallas import tpu as pltpu

# ----------------------- model configuration (small, synthetic) --------------------
DIM = 4        # ODE dimension (VolNet requires dim > 2)
LAYERS = 4     # sub-layers per Symp2DStep
WIDTH = 8      # hidden width of each ridge sub-layer
BATCH = 2
N_SUB = (DIM - 1) * LAYERS   # total ridge sub-layers across the whole VolNet

MAX_BLOCK_B = 4096           # batch-tile width (lanes) per grid step


def _round_up(n, m):
    return ((n + m - 1) // m) * m


# ----------------------------------- Pallas kernel ---------------------------------
def _volnet_kernel(dt_ref, x_ref, w_ref, a_ref, b_ref, o_ref, *, dim, layers):
    """One batch tile of the full VolNet forward.

    Layouts:
      x_ref / o_ref : (dim, block_b)   -- components on sublanes, batch on lanes
      w/a/b refs    : (width, n_sub)   -- hidden width on sublanes, sub-layer id on lanes
      dt_ref        : (1,) f32 in SMEM
    """
    dt = dt_ref[0]

    # ---- hoisted parameter prep (tiny (W, N_SUB) tiles, computed once per tile) ----
    w = w_ref[...]
    wh = 0.5 * w                                   # sigmoid(z) = 0.5 * (tanh(z/2) + 1)
    bh = 0.5 * b_ref[...]
    awh = (0.5 * dt) * (a_ref[...] * w)            # 0.5 * dt * a_k * w_k       (W, N_SUB)
    const = jnp.sum(awh, axis=0, keepdims=True)    # sum_k 0.5*dt*a_k*w_k       (1, N_SUB)

    # ---- state rows held in vregs; batch fills the 128-lane axis ----
    rows = [x_ref[r:r + 1, :] for r in range(dim)]   # each (1, block_b)

    for i in range(dim - 1):              # VolNet: Symp2DStep acting on pair (i, i+1)
        for l in range(layers):           # Symp2DStep: `layers` ridge sub-layers
            p = i * layers + l
            if l % 2 == 0:
                upd, src = i, i + 1
            else:
                upd, src = i + 1, i
            wk = wh[:, p:p + 1]           # (W, 1)
            bk = bh[:, p:p + 1]           # (W, 1)
            ak = awh[:, p:p + 1]          # (W, 1)
            q = rows[src]                 # (1, block_b) source component
            t = jnp.tanh(q * wk + bk)     # (W, block_b) = one f32 vreg; single EUP op
            # grad = dt * sum_k a_k w_k sigmoid(w_k q + b_k)
            #      = sum_k awh_k * tanh(0.5(w_k q + b_k)) + sum_k awh_k
            grad = jnp.sum(t * ak, axis=0, keepdims=True) + const[:, p:p + 1]
            rows[upd] = rows[upd] + grad                            # single-row update

    for r in range(dim):
        o_ref[r:r + 1, :] = rows[r]       # lane-dense stores


# ----------------------------------- wrapper ---------------------------------------
def volnet_forward(x, dt, w, a, b, *, dim=DIM, layers=LAYERS, max_block_b=MAX_BLOCK_B):
    x32 = jnp.asarray(x, jnp.float32)
    bsz, d = x32.shape
    assert d == dim
    n_sub, width = w.shape
    assert n_sub == (dim - 1) * layers

    # layout plumbing: batch -> lanes (padded to a multiple of 128), components/width -> sublanes
    block_b = min(max_block_b, _round_up(max(bsz, 1), 128))
    b_pad = _round_up(bsz, block_b)
    x_t = jnp.pad(x32.T, ((0, 0), (0, b_pad - bsz)))    # (dim, b_pad)
    w_t = jnp.asarray(w, jnp.float32).T                 # (width, n_sub)
    a_t = jnp.asarray(a, jnp.float32).T
    b_t = jnp.asarray(b, jnp.float32).T
    dt_arr = jnp.asarray([dt], dtype=jnp.float32)

    kernel = functools.partial(_volnet_kernel, dim=dim, layers=layers)
    grid = (b_pad // block_b,)

    out_t = pl.pallas_call(
        kernel,
        out_shape=jax.ShapeDtypeStruct((dim, b_pad), jnp.float32),
        grid_spec=pltpu.PrefetchScalarGridSpec(
            num_scalar_prefetch=0,
            grid=grid,
            in_specs=[
                pl.BlockSpec(memory_space=pltpu.MemorySpace.SMEM),   # dt scalar
                pl.BlockSpec((dim, block_b), lambda g: (0, g)),      # x batch tile
                pl.BlockSpec((width, n_sub), lambda g: (0, 0)),      # w (VMEM-resident)
                pl.BlockSpec((width, n_sub), lambda g: (0, 0)),      # a (VMEM-resident)
                pl.BlockSpec((width, n_sub), lambda g: (0, 0)),      # b (VMEM-resident)
            ],
            out_specs=pl.BlockSpec((dim, block_b), lambda g: (0, g)),
        ),
        compiler_params=pltpu.CompilerParams(
            dimension_semantics=("parallel",),   # shard batch tiles across TCs on v7x
        ),
    )(dt_arr, x_t, w_t, a_t, b_t)

    return out_t[:, :bsz].T   # drop batch padding, back to (B, D)


# -------------------------- pure-JAX reference (same math) -------------------------
def volnet_reference(x, dt, w, a, b, *, dim=DIM, layers=LAYERS):
    x = x.astype(jnp.float32)
    for i in range(dim - 1):
        for l in range(layers):
            p = i * layers + l
            wk, ak, bk = w[p], a[p], b[p]           # (W,)
            if l % 2 == 0:
                upd, src = i, i + 1
            else:
                upd, src = i + 1, i
            q = x[:, src:src + 1]
            s = jax.nn.sigmoid(q * wk[None, :] + bk[None, :])
            grad = jnp.sum(s * (ak * wk)[None, :], axis=-1, keepdims=True)
            x = x.at[:, upd:upd + 1].add(dt * grad)
    return x


# ------------------------------------- main -----------------------------------------
if __name__ == "__main__":
    key = jax.random.PRNGKey(0)
    kx, kw, ka, kb = jax.random.split(key, 4)

    x = jax.random.normal(kx, (BATCH, DIM), dtype=jnp.float32)
    W = 0.5 * jax.random.normal(kw, (N_SUB, WIDTH), dtype=jnp.float32)
    A = 0.5 * jax.random.normal(ka, (N_SUB, WIDTH), dtype=jnp.float32)
    B = 0.1 * jax.random.normal(kb, (N_SUB, WIDTH), dtype=jnp.float32)
    dt = 0.1

    out = volnet_forward(x, dt, W, A, B)
    out = jax.block_until_ready(out)

    ref = volnet_reference(x, dt, W, A, B)
    assert out.shape == x.shape and out.dtype == jnp.float32
    assert bool(jnp.allclose(out, ref, atol=1e-5, rtol=1e-4)), "mismatch vs JAX reference"

    print("KERNEL_OK")
</pallas_src>

<mosaic_0001>
module attributes {stable_mosaic.version = 11 : i64} {
  func.func @_volnet_kernel(%arg0: i32, %arg1: memref<1xf32, #tpu.memory_space<smem>>, %arg2: memref<4x128xf32, #tpu.memory_space<vmem>>, %arg3: memref<8x12xf32, #tpu.memory_space<vmem>>, %arg4: memref<8x12xf32, #tpu.memory_space<vmem>>, %arg5: memref<8x12xf32, #tpu.memory_space<vmem>>, %arg6: memref<4x128xf32, #tpu.memory_space<vmem>>) attributes {dimension_semantics = [#tpu.dimension_semantics<parallel>], iteration_bounds = array<i64: 1>, scalar_prefetch = 0 : i64, scratch_operands = 0 : i64, tpu.core_type = #tpu.core_type<tc>, window_params = [{transform_indices = @transform_0, window_bounds = array<i64: 1>}, {transform_indices = @transform_1, window_bounds = array<i64: 4, 128>}, {pipeline_mode = #tpu.pipeline_mode<synchronous>, transform_indices = @transform_2, window_bounds = array<i64: 8, 12>}, {pipeline_mode = #tpu.pipeline_mode<synchronous>, transform_indices = @transform_3, window_bounds = array<i64: 8, 12>}, {pipeline_mode = #tpu.pipeline_mode<synchronous>, transform_indices = @transform_4, window_bounds = array<i64: 8, 12>}, {transform_indices = @transform_5, window_bounds = array<i64: 4, 128>}]} {
    %c0 = arith.constant 0 : index
    %0 = memref.load %arg1[%c0] : memref<1xf32, #tpu.memory_space<smem>>
    %c0_0 = arith.constant 0 : index
    %c0_1 = arith.constant 0 : index
    %1 = vector.load %arg3[%c0_0, %c0_1] : memref<8x12xf32, #tpu.memory_space<vmem>>, vector<8x12xf32>
    %cst = arith.constant 5.000000e-01 : f32
    %2 = vector.broadcast %cst : f32 to vector<8x12xf32>
    %3 = arith.mulf %2, %1 : vector<8x12xf32>
    %c0_2 = arith.constant 0 : index
    %c0_3 = arith.constant 0 : index
    %4 = vector.load %arg5[%c0_2, %c0_3] : memref<8x12xf32, #tpu.memory_space<vmem>>, vector<8x12xf32>
    %cst_4 = arith.constant 5.000000e-01 : f32
    %5 = vector.broadcast %cst_4 : f32 to vector<8x12xf32>
    %6 = arith.mulf %5, %4 : vector<8x12xf32>
    %cst_5 = arith.constant 5.000000e-01 : f32
    %7 = arith.mulf %cst_5, %0 : f32
    %c0_6 = arith.constant 0 : index
    %c0_7 = arith.constant 0 : index
    %8 = vector.load %arg4[%c0_6, %c0_7] : memref<8x12xf32, #tpu.memory_space<vmem>>, vector<8x12xf32>
    %9 = arith.mulf %8, %1 : vector<8x12xf32>
    %10 = vector.broadcast %7 : f32 to vector<8x12xf32>
    %11 = arith.mulf %10, %9 : vector<8x12xf32>
    %cst_8 = arith.constant dense<0.000000e+00> : vector<12xf32>
    %12 = vector.multi_reduction <add>, %11, %cst_8 [0] : vector<8x12xf32> to vector<12xf32>
    %13 = vector.shape_cast %12 : vector<12xf32> to vector<1x12xf32>
    %c0_9 = arith.constant 0 : index
    %c0_10 = arith.constant 0 : index
    %14 = vector.load %arg2[%c0_9, %c0_10] : memref<4x128xf32, #tpu.memory_space<vmem>>, vector<1x128xf32>
    %c1 = arith.constant 1 : index
    %c0_11 = arith.constant 0 : index
    %15 = vector.load %arg2[%c1, %c0_11] : memref<4x128xf32, #tpu.memory_space<vmem>>, vector<1x128xf32>
    %c2 = arith.constant 2 : index
    %c0_12 = arith.constant 0 : index
    %16 = vector.load %arg2[%c2, %c0_12] : memref<4x128xf32, #tpu.memory_space<vmem>>, vector<1x128xf32>
    %c3 = arith.constant 3 : index
    %c0_13 = arith.constant 0 : index
    %17 = vector.load %arg2[%c3, %c0_13] : memref<4x128xf32, #tpu.memory_space<vmem>>, vector<1x128xf32>
    %18 = vector.extract_strided_slice %3 {offsets = [0, 0], sizes = [8, 1], strides = [1, 1]} : vector<8x12xf32> to vector<8x1xf32>
    %19 = vector.extract_strided_slice %6 {offsets = [0, 0], sizes = [8, 1], strides = [1, 1]} : vector<8x12xf32> to vector<8x1xf32>
    %20 = vector.extract_strided_slice %11 {offsets = [0, 0], sizes = [8, 1], strides = [1, 1]} : vector<8x12xf32> to vector<8x1xf32>
    %21 = vector.broadcast %15 : vector<1x128xf32> to vector<8x128xf32>
    %22 = vector.broadcast %18 : vector<8x1xf32> to vector<8x128xf32>
    %23 = arith.mulf %21, %22 : vector<8x128xf32>
    %24 = vector.broadcast %19 : vector<8x1xf32> to vector<8x128xf32>
    %25 = arith.addf %23, %24 : vector<8x128xf32>
    %26 = math.tanh %25 : vector<8x128xf32>
    %27 = vector.broadcast %20 : vector<8x1xf32> to vector<8x128xf32>
    %28 = arith.mulf %26, %27 : vector<8x128xf32>
    %cst_14 = arith.constant dense<0.000000e+00> : vector<128xf32>
    %29 = vector.multi_reduction <add>, %28, %cst_14 [0] : vector<8x128xf32> to vector<128xf32>
    %30 = vector.shape_cast %29 : vector<128xf32> to vector<1x128xf32>
    %31 = vector.extract_strided_slice %13 {offsets = [0, 0], sizes = [1, 1], strides = [1, 1]} : vector<1x12xf32> to vector<1x1xf32>
    %32 = vector.broadcast %31 : vector<1x1xf32> to vector<1x128xf32>
    %33 = arith.addf %30, %32 : vector<1x128xf32>
    %34 = arith.addf %14, %33 : vector<1x128xf32>
    %35 = vector.extract_strided_slice %3 {offsets = [0, 1], sizes = [8, 1], strides = [1, 1]} : vector<8x12xf32> to vector<8x1xf32>
    %36 = vector.extract_strided_slice %6 {offsets = [0, 1], sizes = [8, 1], strides = [1, 1]} : vector<8x12xf32> to vector<8x1xf32>
    %37 = vector.extract_strided_slice %11 {offsets = [0, 1], sizes = [8, 1], strides = [1, 1]} : vector<8x12xf32> to vector<8x1xf32>
    %38 = vector.broadcast %34 : vector<1x128xf32> to vector<8x128xf32>
    %39 = vector.broadcast %35 : vector<8x1xf32> to vector<8x128xf32>
    %40 = arith.mulf %38, %39 : vector<8x128xf32>
    %41 = vector.broadcast %36 : vector<8x1xf32> to vector<8x128xf32>
    %42 = arith.addf %40, %41 : vector<8x128xf32>
    %43 = math.tanh %42 : vector<8x128xf32>
    %44 = vector.broadcast %37 : vector<8x1xf32> to vector<8x128xf32>
    %45 = arith.mulf %43, %44 : vector<8x128xf32>
    %cst_15 = arith.constant dense<0.000000e+00> : vector<128xf32>
    %46 = vector.multi_reduction <add>, %45, %cst_15 [0] : vector<8x128xf32> to vector<128xf32>
    %47 = vector.shape_cast %46 : vector<128xf32> to vector<1x128xf32>
    %48 = vector.extract_strided_slice %13 {offsets = [0, 1], sizes = [1, 1], strides = [1, 1]} : vector<1x12xf32> to vector<1x1xf32>
    %49 = vector.broadcast %48 : vector<1x1xf32> to vector<1x128xf32>
    %50 = arith.addf %47, %49 : vector<1x128xf32>
    %51 = arith.addf %15, %50 : vector<1x128xf32>
    %52 = vector.extract_strided_slice %3 {offsets = [0, 2], sizes = [8, 1], strides = [1, 1]} : vector<8x12xf32> to vector<8x1xf32>
    %53 = vector.extract_strided_slice %6 {offsets = [0, 2], sizes = [8, 1], strides = [1, 1]} : vector<8x12xf32> to vector<8x1xf32>
    %54 = vector.extract_strided_slice %11 {offsets = [0, 2], sizes = [8, 1], strides = [1, 1]} : vector<8x12xf32> to vector<8x1xf32>
    %55 = vector.broadcast %51 : vector<1x128xf32> to vector<8x128xf32>
    %56 = vector.broadcast %52 : vector<8x1xf32> to vector<8x128xf32>
    %57 = arith.mulf %55, %56 : vector<8x128xf32>
    %58 = vector.broadcast %53 : vector<8x1xf32> to vector<8x128xf32>
    %59 = arith.addf %57, %58 : vector<8x128xf32>
    %60 = math.tanh %59 : vector<8x128xf32>
    %61 = vector.broadcast %54 : vector<8x1xf32> to vector<8x128xf32>
    %62 = arith.mulf %60, %61 : vector<8x128xf32>
    %cst_16 = arith.constant dense<0.000000e+00> : vector<128xf32>
    %63 = vector.multi_reduction <add>, %62, %cst_16 [0] : vector<8x128xf32> to vector<128xf32>
    %64 = vector.shape_cast %63 : vector<128xf32> to vector<1x128xf32>
    %65 = vector.extract_strided_slice %13 {offsets = [0, 2], sizes = [1, 1], strides = [1, 1]} : vector<1x12xf32> to vector<1x1xf32>
    %66 = vector.broadcast %65 : vector<1x1xf32> to vector<1x128xf32>
    %67 = arith.addf %64, %66 : vector<1x128xf32>
    %68 = arith.addf %34, %67 : vector<1x128xf32>
    %69 = vector.extract_strided_slice %3 {offsets = [0, 3], sizes = [8, 1], strides = [1, 1]} : vector<8x12xf32> to vector<8x1xf32>
    %70 = vector.extract_strided_slice %6 {offsets = [0, 3], sizes = [8, 1], strides = [1, 1]} : vector<8x12xf32> to vector<8x1xf32>
    %71 = vector.extract_strided_slice %11 {offsets = [0, 3], sizes = [8, 1], strides = [1, 1]} : vector<8x12xf32> to vector<8x1xf32>
    %72 = vector.broadcast %68 : vector<1x128xf32> to vector<8x128xf32>
    %73 = vector.broadcast %69 : vector<8x1xf32> to vector<8x128xf32>
    %74 = arith.mulf %72, %73 : vector<8x128xf32>
    %75 = vector.broadcast %70 : vector<8x1xf32> to vector<8x128xf32>
    %76 = arith.addf %74, %75 : vector<8x128xf32>
    %77 = math.tanh %76 : vector<8x128xf32>
    %78 = vector.broadcast %71 : vector<8x1xf32> to vector<8x128xf32>
    %79 = arith.mulf %77, %78 : vector<8x128xf32>
    %cst_17 = arith.constant dense<0.000000e+00> : vector<128xf32>
    %80 = vector.multi_reduction <add>, %79, %cst_17 [0] : vector<8x128xf32> to vector<128xf32>
    %81 = vector.shape_cast %80 : vector<128xf32> to vector<1x128xf32>
    %82 = vector.extract_strided_slice %13 {offsets = [0, 3], sizes = [1, 1], strides = [1, 1]} : vector<1x12xf32> to vector<1x1xf32>
    %83 = vector.broadcast %82 : vector<1x1xf32> to vector<1x128xf32>
    %84 = arith.addf %81, %83 : vector<1x128xf32>
    %85 = arith.addf %51, %84 : vector<1x128xf32>
    %86 = vector.extract_strided_slice %3 {offsets = [0, 4], sizes = [8, 1], strides = [1, 1]} : vector<8x12xf32> to vector<8x1xf32>
    %87 = vector.extract_strided_slice %6 {offsets = [0, 4], sizes = [8, 1], strides = [1, 1]} : vector<8x12xf32> to vector<8x1xf32>
    %88 = vector.extract_strided_slice %11 {offsets = [0, 4], sizes = [8, 1], strides = [1, 1]} : vector<8x12xf32> to vector<8x1xf32>
    %89 = vector.broadcast %16 : vector<1x128xf32> to vector<8x128xf32>
    %90 = vector.broadcast %86 : vector<8x1xf32> to vector<8x128xf32>
    %91 = arith.mulf %89, %90 : vector<8x128xf32>
    %92 = vector.broadcast %87 : vector<8x1xf32> to vector<8x128xf32>
    %93 = arith.addf %91, %92 : vector<8x128xf32>
    %94 = math.tanh %93 : vector<8x128xf32>
    %95 = vector.broadcast %88 : vector<8x1xf32> to vector<8x128xf32>
    %96 = arith.mulf %94, %95 : vector<8x128xf32>
    %cst_18 = arith.constant dense<0.000000e+00> : vector<128xf32>
    %97 = vector.multi_reduction <add>, %96, %cst_18 [0] : vector<8x128xf32> to vector<128xf32>
    %98 = vector.shape_cast %97 : vector<128xf32> to vector<1x128xf32>
    %99 = vector.extract_strided_slice %13 {offsets = [0, 4], sizes = [1, 1], strides = [1, 1]} : vector<1x12xf32> to vector<1x1xf32>
    %100 = vector.broadcast %99 : vector<1x1xf32> to vector<1x128xf32>
    %101 = arith.addf %98, %100 : vector<1x128xf32>
    %102 = arith.addf %85, %101 : vector<1x128xf32>
    %103 = vector.extract_strided_slice %3 {offsets = [0, 5], sizes = [8, 1], strides = [1, 1]} : vector<8x12xf32> to vector<8x1xf32>
    %104 = vector.extract_strided_slice %6 {offsets = [0, 5], sizes = [8, 1], strides = [1, 1]} : vector<8x12xf32> to vector<8x1xf32>
    %105 = vector.extract_strided_slice %11 {offsets = [0, 5], sizes = [8, 1], strides = [1, 1]} : vector<8x12xf32> to vector<8x1xf32>
    %106 = vector.broadcast %102 : vector<1x128xf32> to vector<8x128xf32>
    %107 = vector.broadcast %103 : vector<8x1xf32> to vector<8x128xf32>
    %108 = arith.mulf %106, %107 : vector<8x128xf32>
    %109 = vector.broadcast %104 : vector<8x1xf32> to vector<8x128xf32>
    %110 = arith.addf %108, %109 : vector<8x128xf32>
    %111 = math.tanh %110 : vector<8x128xf32>
    %112 = vector.broadcast %105 : vector<8x1xf32> to vector<8x128xf32>
    %113 = arith.mulf %111, %112 : vector<8x128xf32>
    %cst_19 = arith.constant dense<0.000000e+00> : vector<128xf32>
    %114 = vector.multi_reduction <add>, %113, %cst_19 [0] : vector<8x128xf32> to vector<128xf32>
    %115 = vector.shape_cast %114 : vector<128xf32> to vector<1x128xf32>
    %116 = vector.extract_strided_slice %13 {offsets = [0, 5], sizes = [1, 1], strides = [1, 1]} : vector<1x12xf32> to vector<1x1xf32>
    %117 = vector.broadcast %116 : vector<1x1xf32> to vector<1x128xf32>
    %118 = arith.addf %115, %117 : vector<1x128xf32>
    %119 = arith.addf %16, %118 : vector<1x128xf32>
    %120 = vector.extract_strided_slice %3 {offsets = [0, 6], sizes = [8, 1], strides = [1, 1]} : vector<8x12xf32> to vector<8x1xf32>
    %121 = vector.extract_strided_slice %6 {offsets = [0, 6], sizes = [8, 1], strides = [1, 1]} : vector<8x12xf32> to vector<8x1xf32>
    %122 = vector.extract_strided_slice %11 {offsets = [0, 6], sizes = [8, 1], strides = [1, 1]} : vector<8x12xf32> to vector<8x1xf32>
    %123 = vector.broadcast %119 : vector<1x128xf32> to vector<8x128xf32>
    %124 = vector.broadcast %120 : vector<8x1xf32> to vector<8x128xf32>
    %125 = arith.mulf %123, %124 : vector<8x128xf32>
    %126 = vector.broadcast %121 : vector<8x1xf32> to vector<8x128xf32>
    %127 = arith.addf %125, %126 : vector<8x128xf32>
    %128 = math.tanh %127 : vector<8x128xf32>
    %129 = vector.broadcast %122 : vector<8x1xf32> to vector<8x128xf32>
    %130 = arith.mulf %128, %129 : vector<8x128xf32>
    %cst_20 = arith.constant dense<0.000000e+00> : vector<128xf32>
    %131 = vector.multi_reduction <add>, %130, %cst_20 [0] : vector<8x128xf32> to vector<128xf32>
    %132 = vector.shape_cast %131 : vector<128xf32> to vector<1x128xf32>
    %133 = vector.extract_strided_slice %13 {offsets = [0, 6], sizes = [1, 1], strides = [1, 1]} : vector<1x12xf32> to vector<1x1xf32>
    %134 = vector.broadcast %133 : vector<1x1xf32> to vector<1x128xf32>
    %135 = arith.addf %132, %134 : vector<1x128xf32>
    %136 = arith.addf %102, %135 : vector<1x128xf32>
    %137 = vector.extract_strided_slice %3 {offsets = [0, 7], sizes = [8, 1], strides = [1, 1]} : vector<8x12xf32> to vector<8x1xf32>
    %138 = vector.extract_strided_slice %6 {offsets = [0, 7], sizes = [8, 1], strides = [1, 1]} : vector<8x12xf32> to vector<8x1xf32>
    %139 = vector.extract_strided_slice %11 {offsets = [0, 7], sizes = [8, 1], strides = [1, 1]} : vector<8x12xf32> to vector<8x1xf32>
    %140 = vector.broadcast %136 : vector<1x128xf32> to vector<8x128xf32>
    %141 = vector.broadcast %137 : vector<8x1xf32> to vector<8x128xf32>
    %142 = arith.mulf %140, %141 : vector<8x128xf32>
    %143 = vector.broadcast %138 : vector<8x1xf32> to vector<8x128xf32>
    %144 = arith.addf %142, %143 : vector<8x128xf32>
    %145 = math.tanh %144 : vector<8x128xf32>
    %146 = vector.broadcast %139 : vector<8x1xf32> to vector<8x128xf32>
    %147 = arith.mulf %145, %146 : vector<8x128xf32>
    %cst_21 = arith.constant dense<0.000000e+00> : vector<128xf32>
    %148 = vector.multi_reduction <add>, %147, %cst_21 [0] : vector<8x128xf32> to vector<128xf32>
    %149 = vector.shape_cast %148 : vector<128xf32> to vector<1x128xf32>
    %150 = vector.extract_strided_slice %13 {offsets = [0, 7], sizes = [1, 1], strides = [1, 1]} : vector<1x12xf32> to vector<1x1xf32>
    %151 = vector.broadcast %150 : vector<1x1xf32> to vector<1x128xf32>
    %152 = arith.addf %149, %151 : vector<1x128xf32>
    %153 = arith.addf %119, %152 : vector<1x128xf32>
    %154 = vector.extract_strided_slice %3 {offsets = [0, 8], sizes = [8, 1], strides = [1, 1]} : vector<8x12xf32> to vector<8x1xf32>
    %155 = vector.extract_strided_slice %6 {offsets = [0, 8], sizes = [8, 1], strides = [1, 1]} : vector<8x12xf32> to vector<8x1xf32>
    %156 = vector.extract_strided_slice %11 {offsets = [0, 8], sizes = [8, 1], strides = [1, 1]} : vector<8x12xf32> to vector<8x1xf32>
    %157 = vector.broadcast %17 : vector<1x128xf32> to vector<8x128xf32>
    %158 = vector.broadcast %154 : vector<8x1xf32> to vector<8x128xf32>
    %159 = arith.mulf %157, %158 : vector<8x128xf32>
    %160 = vector.broadcast %155 : vector<8x1xf32> to vector<8x128xf32>
    %161 = arith.addf %159, %160 : vector<8x128xf32>
    %162 = math.tanh %161 : vector<8x128xf32>
    %163 = vector.broadcast %156 : vector<8x1xf32> to vector<8x128xf32>
    %164 = arith.mulf %162, %163 : vector<8x128xf32>
    %cst_22 = arith.constant dense<0.000000e+00> : vector<128xf32>
    %165 = vector.multi_reduction <add>, %164, %cst_22 [0] : vector<8x128xf32> to vector<128xf32>
    %166 = vector.shape_cast %165 : vector<128xf32> to vector<1x128xf32>
    %167 = vector.extract_strided_slice %13 {offsets = [0, 8], sizes = [1, 1], strides = [1, 1]} : vector<1x12xf32> to vector<1x1xf32>
    %168 = vector.broadcast %167 : vector<1x1xf32> to vector<1x128xf32>
    %169 = arith.addf %166, %168 : vector<1x128xf32>
    %170 = arith.addf %153, %169 : vector<1x128xf32>
    %171 = vector.extract_strided_slice %3 {offsets = [0, 9], sizes = [8, 1], strides = [1, 1]} : vector<8x12xf32> to vector<8x1xf32>
    %172 = vector.extract_strided_slice %6 {offsets = [0, 9], sizes = [8, 1], strides = [1, 1]} : vector<8x12xf32> to vector<8x1xf32>
    %173 = vector.extract_strided_slice %11 {offsets = [0, 9], sizes = [8, 1], strides = [1, 1]} : vector<8x12xf32> to vector<8x1xf32>
    %174 = vector.broadcast %170 : vector<1x128xf32> to vector<8x128xf32>
    %175 = vector.broadcast %171 : vector<8x1xf32> to vector<8x128xf32>
    %176 = arith.mulf %174, %175 : vector<8x128xf32>
    %177 = vector.broadcast %172 : vector<8x1xf32> to vector<8x128xf32>
    %178 = arith.addf %176, %177 : vector<8x128xf32>
    %179 = math.tanh %178 : vector<8x128xf32>
    %180 = vector.broadcast %173 : vector<8x1xf32> to vector<8x128xf32>
    %181 = arith.mulf %179, %180 : vector<8x128xf32>
    %cst_23 = arith.constant dense<0.000000e+00> : vector<128xf32>
    %182 = vector.multi_reduction <add>, %181, %cst_23 [0] : vector<8x128xf32> to vector<128xf32>
    %183 = vector.shape_cast %182 : vector<128xf32> to vector<1x128xf32>
    %184 = vector.extract_strided_slice %13 {offsets = [0, 9], sizes = [1, 1], strides = [1, 1]} : vector<1x12xf32> to vector<1x1xf32>
    %185 = vector.broadcast %184 : vector<1x1xf32> to vector<1x128xf32>
    %186 = arith.addf %183, %185 : vector<1x128xf32>
    %187 = arith.addf %17, %186 : vector<1x128xf32>
    %188 = vector.extract_strided_slice %3 {offsets = [0, 10], sizes = [8, 1], strides = [1, 1]} : vector<8x12xf32> to vector<8x1xf32>
    %189 = vector.extract_strided_slice %6 {offsets = [0, 10], sizes = [8, 1], strides = [1, 1]} : vector<8x12xf32> to vector<8x1xf32>
    %190 = vector.extract_strided_slice %11 {offsets = [0, 10], sizes = [8, 1], strides = [1, 1]} : vector<8x12xf32> to vector<8x1xf32>
    %191 = vector.broadcast %187 : vector<1x128xf32> to vector<8x128xf32>
    %192 = vector.broadcast %188 : vector<8x1xf32> to vector<8x128xf32>
    %193 = arith.mulf %191, %192 : vector<8x128xf32>
    %194 = vector.broadcast %189 : vector<8x1xf32> to vector<8x128xf32>
    %195 = arith.addf %193, %194 : vector<8x128xf32>
    %196 = math.tanh %195 : vector<8x128xf32>
    %197 = vector.broadcast %190 : vector<8x1xf32> to vector<8x128xf32>
    %198 = arith.mulf %196, %197 : vector<8x128xf32>
    %cst_24 = arith.constant dense<0.000000e+00> : vector<128xf32>
    %199 = vector.multi_reduction <add>, %198, %cst_24 [0] : vector<8x128xf32> to vector<128xf32>
    %200 = vector.shape_cast %199 : vector<128xf32> to vector<1x128xf32>
    %201 = vector.extract_strided_slice %13 {offsets = [0, 10], sizes = [1, 1], strides = [1, 1]} : vector<1x12xf32> to vector<1x1xf32>
    %202 = vector.broadcast %201 : vector<1x1xf32> to vector<1x128xf32>
    %203 = arith.addf %200, %202 : vector<1x128xf32>
    %204 = arith.addf %170, %203 : vector<1x128xf32>
    %205 = vector.extract_strided_slice %3 {offsets = [0, 11], sizes = [8, 1], strides = [1, 1]} : vector<8x12xf32> to vector<8x1xf32>
    %206 = vector.extract_strided_slice %6 {offsets = [0, 11], sizes = [8, 1], strides = [1, 1]} : vector<8x12xf32> to vector<8x1xf32>
    %207 = vector.extract_strided_slice %11 {offsets = [0, 11], sizes = [8, 1], strides = [1, 1]} : vector<8x12xf32> to vector<8x1xf32>
    %208 = vector.broadcast %204 : vector<1x128xf32> to vector<8x128xf32>
    %209 = vector.broadcast %205 : vector<8x1xf32> to vector<8x128xf32>
    %210 = arith.mulf %208, %209 : vector<8x128xf32>
    %211 = vector.broadcast %206 : vector<8x1xf32> to vector<8x128xf32>
    %212 = arith.addf %210, %211 : vector<8x128xf32>
    %213 = math.tanh %212 : vector<8x128xf32>
    %214 = vector.broadcast %207 : vector<8x1xf32> to vector<8x128xf32>
    %215 = arith.mulf %213, %214 : vector<8x128xf32>
    %cst_25 = arith.constant dense<0.000000e+00> : vector<128xf32>
    %216 = vector.multi_reduction <add>, %215, %cst_25 [0] : vector<8x128xf32> to vector<128xf32>
    %217 = vector.shape_cast %216 : vector<128xf32> to vector<1x128xf32>
    %218 = vector.extract_strided_slice %13 {offsets = [0, 11], sizes = [1, 1], strides = [1, 1]} : vector<1x12xf32> to vector<1x1xf32>
    %219 = vector.broadcast %218 : vector<1x1xf32> to vector<1x128xf32>
    %220 = arith.addf %217, %219 : vector<1x128xf32>
    %221 = arith.addf %187, %220 : vector<1x128xf32>
    %c0_26 = arith.constant 0 : index
    %c0_27 = arith.constant 0 : index
    %222 = vector.load %arg6[%c0_26, %c0_27] : memref<4x128xf32, #tpu.memory_space<vmem>>, vector<1x128xf32>
    tpu.vector_store %arg6[%c0_26, %c0_27], %68 {strides = array<i32>} : memref<4x128xf32, #tpu.memory_space<vmem>>, vector<1x128xf32>,
    %c1_28 = arith.constant 1 : index
    %c0_29 = arith.constant 0 : index
    %223 = vector.load %arg6[%c1_28, %c0_29] : memref<4x128xf32, #tpu.memory_space<vmem>>, vector<1x128xf32>
    tpu.vector_store %arg6[%c1_28, %c0_29], %136 {strides = array<i32>} : memref<4x128xf32, #tpu.memory_space<vmem>>, vector<1x128xf32>,
    %c2_30 = arith.constant 2 : index
    %c0_31 = arith.constant 0 : index
    %224 = vector.load %arg6[%c2_30, %c0_31] : memref<4x128xf32, #tpu.memory_space<vmem>>, vector<1x128xf32>
    tpu.vector_store %arg6[%c2_30, %c0_31], %204 {strides = array<i32>} : memref<4x128xf32, #tpu.memory_space<vmem>>, vector<1x128xf32>,
    %c3_32 = arith.constant 3 : index
    %c0_33 = arith.constant 0 : index
    %225 = vector.load %arg6[%c3_32, %c0_33] : memref<4x128xf32, #tpu.memory_space<vmem>>, vector<1x128xf32>
    tpu.vector_store %arg6[%c3_32, %c0_33], %221 {strides = array<i32>} : memref<4x128xf32, #tpu.memory_space<vmem>>, vector<1x128xf32>,
    return
  }
  func.func @transform_0(%arg0: i32) -> i32 {
    %c0_i32 = arith.constant 0 : i32
    %c0_i32_0 = arith.constant 0 : i32
    return %c0_i32 : i32
  }
  func.func @transform_1(%arg0: i32) -> (i32, i32) {
    %c0_i32 = arith.constant 0 : i32
    %c0_i32_0 = arith.constant 0 : i32
    return %c0_i32, %arg0 : i32, i32
  }
  func.func @transform_2(%arg0: i32) -> (i32, i32) {
    %c0_i32 = arith.constant 0 : i32
    %c0_i32_0 = arith.constant 0 : i32
    %c0_i32_1 = arith.constant 0 : i32
    return %c0_i32, %c0_i32_0 : i32, i32
  }
  func.func @transform_3(%arg0: i32) -> (i32, i32) {
    %c0_i32 = arith.constant 0 : i32
    %c0_i32_0 = arith.constant 0 : i32
    %c0_i32_1 = arith.constant 0 : i32
    return %c0_i32, %c0_i32_0 : i32, i32
  }
  func.func @transform_4(%arg0: i32) -> (i32, i32) {
    %c0_i32 = arith.constant 0 : i32
    %c0_i32_0 = arith.constant 0 : i32
    %c0_i32_1 = arith.constant 0 : i32
    return %c0_i32, %c0_i32_0 : i32, i32
  }
  func.func @transform_5(%arg0: i32) -> (i32, i32) {
    %c0_i32 = arith.constant 0 : i32
    %c0_i32_0 = arith.constant 0 : i32
    return %c0_i32, %arg0 : i32, i32
  }
}

</mosaic_0001>

<llo_original>
// kernel: tpu_custom_call.1
$region0: #{tpu_custom_call.1}
  #allocation0 [shape = 'u32[]', space=smem, size = 0x4, offset = 0x4, fixed_abs, tag = 'smem constant byte address 0x4 - core index']
  #allocation1 [shape = 'u32[72,128]{1,0:T(1,128)}', space=vmem, size = 0x9000, scoped, tag = 'internal scratch']
  #allocation2 [shape = 'f32[1]{0:T(128)S(6)}', space=smem, size = 0x200, scoped, tag = 'scoped memory for tpu_custom_call.1']
  %s0 = inlined_call_operand.<no memory space> [shape: f32[1], index: 0, kind: input, shape index: {}]
  %s1 = inlined_call_operand.hbm [shape: f32[4,128], index: 1, kind: input, shape index: {}]
  %s2 = inlined_call_operand.hbm [shape: f32[8,12], index: 2, kind: input, shape index: {}]
  %s3 = inlined_call_operand.hbm [shape: f32[8,12], index: 3, kind: input, shape index: {}]
  %s4 = inlined_call_operand.hbm [shape: f32[8,12], index: 4, kind: input, shape index: {}]
  %s5 = inlined_call_operand.hbm [shape: f32[4,128], index: 5, kind: output, shape index: {}]
  %s6 = sld [smem:[#allocation0]]
  $region46: #{tpu_custom_call.1} parent=0
    _
  %s8 = ssub.s32 1, %s6
  %s9 = scalar_select 0, %s8, %s6
  %10 = sst [smem:[#allocation2]] %s0
  $region1: #{tpu_custom_call.1} parent=0
    #allocation3 [shape = 'u8[2048]{0}', space=vmem, size = 0x800, scoped, tag = 'input window, operand 1, single buffered']
    #allocation4 [shape = 's32[1]{0}', space=sflag, size = 0x4, scoped, tag = 'scoped memory for tpu_custom_call.1']
    #allocation5 [shape = 's32[1]{0}', space=sflag, size = 0x4, scoped, tag = 'scoped memory for tpu_custom_call.1']
    #allocation6 [shape = 'u8[4096]{0}', space=vmem, size = 0x1000, scoped, tag = 'input window, operand 2, single buffered']
    #allocation7 [shape = 's32[1]{0}', space=sflag, size = 0x4, scoped, tag = 'scoped memory for tpu_custom_call.1']
    #allocation8 [shape = 'u8[4096]{0}', space=vmem, size = 0x1000, scoped, tag = 'input window, operand 3, single buffered']
    #allocation9 [shape = 'u8[4096]{0}', space=vmem, size = 0x1000, scoped, tag = 'input window, operand 4, single buffered']
    #allocation10 [shape = 's32[1]{0}', space=sflag, size = 0x4, scoped, tag = 'scoped memory for tpu_custom_call.1']
    #allocation11 [shape = 'u8[2048]{0}', space=vmem, size = 0x800, scoped, tag = 'output window, operand 0, single buffered']
    %11 = vsyncpa [#allocation4], 0
    %12 = vsyncpa [#allocation7], 0
    %13 = vsyncpa [#allocation10], 0
    %14 = vsyncpa [#allocation5], 0
    // Predicated region
    $region2: #{tpu_custom_call.1} parent=1 // pred_check
      _
    $region3: #{tpu_custom_call.1} parent=1 // pred_check_branch
      %16 = sbr.rel (0) target = $region5
    $region4: #{tpu_custom_call.1} parent=1 // pred_region
      _
    $region5: #{tpu_custom_call.1} parent=1 // pred_fallthru
      _
    // Predicated region
    $region6: #{tpu_custom_call.1} parent=1 // pred_check
      _
    $region7: #{tpu_custom_call.1} parent=1 // pred_check_branch
      %18 = sbr.rel (0) target = $region9
    $region8: #{tpu_custom_call.1} parent=1 // pred_region
      %20 = vsyncadd [#allocation4], 0
      %s22 = sshll.u32 %s1, 4
      %s23 = int_to_ptr.hbm [resolvable:$true] %s22
      %s24 = sshll.u32 [#allocation3], 4
      %s25 = int_to_ptr.vmem [resolvable:$true] %s24
      %27 = dma.hbm_to_vmem [thread:$0]  %s23, 64, %s25, [#allocation4]
    $region9: #{tpu_custom_call.1} parent=1 // pred_fallthru
      _
    // Predicated region
    $region10: #{tpu_custom_call.1} parent=1 // pred_check
      _
    $region11: #{tpu_custom_call.1} parent=1 // pred_check_branch
      %29 = sbr.rel (0) target = $region13
    $region12: #{tpu_custom_call.1} parent=1 // pred_region
      %31 = vsyncadd [#allocation7], 0
      %s33 = sshll.u32 %s2, 4
      %s34 = int_to_ptr.hbm [resolvable:$true] %s33
      %s35 = sshll.u32 [#allocation6], 4
      %s36 = int_to_ptr.vmem [resolvable:$true] %s35
      %38 = dma.hbm_to_vmem [thread:$0]  %s34, 128, %s36, [#allocation7]
    $region13: #{tpu_custom_call.1} parent=1 // pred_fallthru
      _
    // Predicated region
    $region14: #{tpu_custom_call.1} parent=1 // pred_check
      _
    $region15: #{tpu_custom_call.1} parent=1 // pred_check_branch
      %40 = sbr.rel (0) target = $region17
    $region16: #{tpu_custom_call.1} parent=1 // pred_region
      %42 = vsyncadd [#allocation7], 0
      %s44 = sshll.u32 %s3, 4
      %s45 = int_to_ptr.hbm [resolvable:$true] %s44
      %s46 = sshll.u32 [#allocation8], 4
      %s47 = int_to_ptr.vmem [resolvable:$true] %s46
      %49 = dma.hbm_to_vmem [thread:$0]  %s45, 128, %s47, [#allocation7]
    $region17: #{tpu_custom_call.1} parent=1 // pred_fallthru
      _
    // Predicated region
    $region18: #{tpu_custom_call.1} parent=1 // pred_check
      _
    $region19: #{tpu_custom_call.1} parent=1 // pred_check_branch
      %51 = sbr.rel (0) target = $region21
    $region20: #{tpu_custom_call.1} parent=1 // pred_region
      %53 = vsyncadd [#allocation10], 0
      %s55 = sshll.u32 %s4, 4
      %s56 = int_to_ptr.hbm [resolvable:$true] %s55
      %s57 = sshll.u32 [#allocation9], 4
      %s58 = int_to_ptr.vmem [resolvable:$true] %s57
      %60 = dma.hbm_to_vmem [thread:$0]  %s56, 128, %s58, [#allocation10]
    $region21: #{tpu_custom_call.1} parent=1 // pred_fallthru
      _
    // Predicated region
    $region22: #{tpu_custom_call.1} parent=1 // pred_check
      _
    $region23: #{tpu_custom_call.1} parent=1 // pred_check_branch
      %62 = sbr.rel (0) target = $region25
    $region24: #{tpu_custom_call.1} parent=1 // pred_region
      %64 = dma.done [#allocation4], 64
    $region25: #{tpu_custom_call.1} parent=1 // pred_fallthru
      _
    // Predicated region
    $region26: #{tpu_custom_call.1} parent=1 // pred_check
      _
    $region27: #{tpu_custom_call.1} parent=1 // pred_check_branch
      %66 = sbr.rel (0) target = $region29
    $region28: #{tpu_custom_call.1} parent=1 // pred_region
      %68 = dma.done [#allocation7], 128
    $region29: #{tpu_custom_call.1} parent=1 // pred_fallthru
      _
    // Predicated region
    $region30: #{tpu_custom_call.1} parent=1 // pred_check
      _
    $region31: #{tpu_custom_call.1} parent=1 // pred_check_branch
      %70 = sbr.rel (0) target = $region33
    $region32: #{tpu_custom_call.1} parent=1 // pred_region
      %72 = dma.done [#allocation7], 128
    $region33: #{tpu_custom_call.1} parent=1 // pred_fallthru
      _
    // Predicated region
    $region34: #{tpu_custom_call.1} parent=1 // pred_check
      _
    $region35: #{tpu_custom_call.1} parent=1 // pred_check_branch
      %74 = sbr.rel (0) target = $region37
    $region36: #{tpu_custom_call.1} parent=1 // pred_region
      %76 = dma.done [#allocation10], 128
    $region37: #{tpu_custom_call.1} parent=1 // pred_fallthru
      _
    %s77 = sld [smem:[#allocation2]]
    %v78 = vld [vmem:[#allocation6] sm:$0xff]
    %v79 = vmul.f32 %v78, 0.5
    %v80 = vld [vmem:[#allocation9] sm:$0xff]
    %v81 = vmul.f32 %v80, 0.5
    %s82 = smul.f32 %s77, 0.5
    %v83 = vld [vmem:[#allocation8] sm:$0xff]
    %v84 = vmul.f32 %v83, %v78
    %v85 = vstv %s82
    %v86 = vmul.f32 %v85, %v84
    %vm87 = vcmask 97280
    %v88 = vsel %vm87, %v86, 0.0
    %v89 = vrot.slane %v88, 4
    %v90 = vadd.f32 %v88, %v89
    %v91 = vrot.slane %v90, 2
    %v92 = vadd.f32 %v90, %v91
    %v93 = vrot.slane %v92, 1
    %v94 = vadd.f32 %v92, %v93
    %v95 = vld [vmem:[#allocation3] sm:$0x1]
    %v96 = vld [vmem:[#allocation3 + $0x1] sm:$0x1]
    %v97 = vld [vmem:[#allocation3 + $0x2] sm:$0x1]
    %v98 = vld [vmem:[#allocation3 + $0x3] sm:$0x1]
    %v99 = vperm.slane %v96, 0
    %101 = vset.pattern.permute.xlu0 0
    %102 = vperm.xlu0 %101, %v79
    %v103 = vpop.permute.xlu0 %102
    %v105 = vmul.f32 %v99, %v103
    %107 = vset.pattern.permute.xlu0 0
    %108 = vperm.xlu0 %107, %v81
    %v109 = vpop.permute.xlu0 %108
    %v111 = vadd.f32 %v105, %v109
    %v112 = vtanh.pop %v111
    %114 = vset.pattern.permute.xlu0 0
    %115 = vperm.xlu0 %114, %v86
    %v116 = vpop.permute.xlu0 %115
    %v118 = vmul.f32 %v112, %v116
    %v119 = vrot.slane %v118, 4
    %v120 = vadd.f32 %v118, %v119
    %v121 = vrot.slane %v120, 2
    %v122 = vadd.f32 %v120, %v121
    %v123 = vrot.slane %v122, 1
    %v124 = vadd.f32 %v122, %v123
    %126 = vset.pattern.permute.xlu0 0
    %127 = vperm.xlu0 %126, %v94
    %v128 = vpop.permute.xlu0 %127
    %v130 = vadd.f32 %v124, %v128
    %v131 = vadd.f32 %v95, %v130
    %v132 = vperm.slane %v131, 0
    %133 = vset.pattern.permute.xlu0 1
    %134 = vperm.xlu0 %133, %v79
    %v135 = vpop.permute.xlu0 %134
    %v137 = vmul.f32 %v132, %v135
    %138 = vset.pattern.permute.xlu0 1
    %139 = vperm.xlu0 %138, %v81
    %v140 = vpop.permute.xlu0 %139
    %v142 = vadd.f32 %v137, %v140
    %v143 = vtanh.pop %v142
    %144 = vset.pattern.permute.xlu0 1
    %145 = vperm.xlu0 %144, %v86
    %v146 = vpop.permute.xlu0 %145
    %v148 = vmul.f32 %v143, %v146
    %v149 = vrot.slane %v148, 4
    %v150 = vadd.f32 %v148, %v149
    %v151 = vrot.slane %v150, 2
    %v152 = vadd.f32 %v150, %v151
    %v153 = vrot.slane %v152, 1
    %v154 = vadd.f32 %v152, %v153
    %155 = vset.pattern.permute.xlu0 1
    %156 = vperm.xlu0 %155, %v94
    %v157 = vpop.permute.xlu0 %156
    %v159 = vadd.f32 %v154, %v157
    %v160 = vadd.f32 %v96, %v159
    %v161 = vperm.slane %v160, 0
    %162 = vset.pattern.permute.xlu0 2
    %163 = vperm.xlu0 %162, %v79
    %v164 = vpop.permute.xlu0 %163
    %v166 = vmul.f32 %v161, %v164
    %167 = vset.pattern.permute.xlu0 2
    %168 = vperm.xlu0 %167, %v81
    %v169 = vpop.permute.xlu0 %168
    %v171 = vadd.f32 %v166, %v169
    %v172 = vtanh.pop %v171
    %173 = vset.pattern.permute.xlu0 2
    %174 = vperm.xlu0 %173, %v86
    %v175 = vpop.permute.xlu0 %174
    %v177 = vmul.f32 %v172, %v175
    %v178 = vrot.slane %v177, 4
    %v179 = vadd.f32 %v177, %v178
    %v180 = vrot.slane %v179, 2
    %v181 = vadd.f32 %v179, %v180
    %v182 = vrot.slane %v181, 1
    %v183 = vadd.f32 %v181, %v182
    %184 = vset.pattern.permute.xlu0 2
    %185 = vperm.xlu0 %184, %v94
    %v186 = vpop.permute.xlu0 %185
    %v188 = vadd.f32 %v183, %v186
    %v189 = vadd.f32 %v131, %v188
    %v190 = vperm.slane %v189, 0
    %191 = vset.pattern.permute.xlu0 3
    %192 = vperm.xlu0 %191, %v79
    %v193 = vpop.permute.xlu0 %192
    %v195 = vmul.f32 %v190, %v193
    %196 = vset.pattern.permute.xlu0 3
    %197 = vperm.xlu0 %196, %v81
    %v198 = vpop.permute.xlu0 %197
    %v200 = vadd.f32 %v195, %v198
    %v201 = vtanh.pop %v200
    %202 = vset.pattern.permute.xlu0 3
    %203 = vperm.xlu0 %202, %v86
    %v204 = vpop.permute.xlu0 %203
    %v206 = vmul.f32 %v201, %v204
    %v207 = vrot.slane %v206, 4
    %v208 = vadd.f32 %v206, %v207
    %v209 = vrot.slane %v208, 2
    %v210 = vadd.f32 %v208, %v209
    %v211 = vrot.slane %v210, 1
    %v212 = vadd.f32 %v210, %v211
    %213 = vset.pattern.permute.xlu0 3
    %214 = vperm.xlu0 %213, %v94
    %v215 = vpop.permute.xlu0 %214
    %v217 = vadd.f32 %v212, %v215
    %v218 = vadd.f32 %v160, %v217
    %v219 = vperm.slane %v97, 0
    %220 = vset.pattern.permute.xlu0 4
    %221 = vperm.xlu0 %220, %v79
    %v222 = vpop.permute.xlu0 %221
    %v224 = vmul.f32 %v219, %v222
    %225 = vset.pattern.permute.xlu0 4
    %226 = vperm.xlu0 %225, %v81
    %v227 = vpop.permute.xlu0 %226
    %v229 = vadd.f32 %v224, %v227
    %v230 = vtanh.pop %v229
    %231 = vset.pattern.permute.xlu0 4
    %232 = vperm.xlu0 %231, %v86
    %v233 = vpop.permute.xlu0 %232
    %v235 = vmul.f32 %v230, %v233
    %v236 = vrot.slane %v235, 4
    %v237 = vadd.f32 %v235, %v236
    %v238 = vrot.slane %v237, 2
    %v239 = vadd.f32 %v237, %v238
    %v240 = vrot.slane %v239, 1
    %v241 = vadd.f32 %v239, %v240
    %242 = vset.pattern.permute.xlu0 4
    %243 = vperm.xlu0 %242, %v94
    %v244 = vpop.permute.xlu0 %243
    %v246 = vadd.f32 %v241, %v244
    %v247 = vadd.f32 %v218, %v246
    %v248 = vperm.slane %v247, 0
    %249 = vset.pattern.permute.xlu0 5
    %250 = vperm.xlu0 %249, %v79
    %v251 = vpop.permute.xlu0 %250
    %v253 = vmul.f32 %v248, %v251
    %254 = vset.pattern.permute.xlu0 5
    %255 = vperm.xlu0 %254, %v81
    %v256 = vpop.permute.xlu0 %255
    %v258 = vadd.f32 %v253, %v256
    %v259 = vtanh.pop %v258
    %260 = vset.pattern.permute.xlu0 5
    %261 = vperm.xlu0 %260, %v86
    %v262 = vpop.permute.xlu0 %261
    %v264 = vmul.f32 %v259, %v262
    %v265 = vrot.slane %v264, 4
    %v266 = vadd.f32 %v264, %v265
    %v267 = vrot.slane %v266, 2
    %v268 = vadd.f32 %v266, %v267
    %v269 = vrot.slane %v268, 1
    %v270 = vadd.f32 %v268, %v269
    %271 = vset.pattern.permute.xlu0 5
    %272 = vperm.xlu0 %271, %v94
    %v273 = vpop.permute.xlu0 %272
    %v275 = vadd.f32 %v270, %v273
    %v276 = vadd.f32 %v97, %v275
    %v277 = vperm.slane %v276, 0
    %278 = vset.pattern.permute.xlu0 6
    %279 = vperm.xlu0 %278, %v79
    %v280 = vpop.permute.xlu0 %279
    %v282 = vmul.f32 %v277, %v280
    %283 = vset.pattern.permute.xlu0 6
    %284 = vperm.xlu0 %283, %v81
    %v285 = vpop.permute.xlu0 %284
    %v287 = vadd.f32 %v282, %v285
    %v288 = vtanh.pop %v287
    %289 = vset.pattern.permute.xlu0 6
    %290 = vperm.xlu0 %289, %v86
    %v291 = vpop.permute.xlu0 %290
    %v293 = vmul.f32 %v288, %v291
    %v294 = vrot.slane %v293, 4
    %v295 = vadd.f32 %v293, %v294
    %v296 = vrot.slane %v295, 2
    %v297 = vadd.f32 %v295, %v296
    %v298 = vrot.slane %v297, 1
    %v299 = vadd.f32 %v297, %v298
    %300 = vset.pattern.permute.xlu0 6
    %301 = vperm.xlu0 %300, %v94
    %v302 = vpop.permute.xlu0 %301
    %v304 = vadd.f32 %v299, %v302
    %v305 = vadd.f32 %v247, %v304
    %v306 = vperm.slane %v305, 0
    %307 = vset.pattern.permute.xlu0 7
    %308 = vperm.xlu0 %307, %v79
    %v309 = vpop.permute.xlu0 %308
    %v311 = vmul.f32 %v306, %v309
    %312 = vset.pattern.permute.xlu0 7
    %313 = vperm.xlu0 %312, %v81
    %v314 = vpop.permute.xlu0 %313
    %v316 = vadd.f32 %v311, %v314
    %v317 = vtanh.pop %v316
    %318 = vset.pattern.permute.xlu0 7
    %319 = vperm.xlu0 %318, %v86
    %v320 = vpop.permute.xlu0 %319
    %v322 = vmul.f32 %v317, %v320
    %v323 = vrot.slane %v322, 4
    %v324 = vadd.f32 %v322, %v323
    %v325 = vrot.slane %v324, 2
    %v326 = vadd.f32 %v324, %v325
    %v327 = vrot.slane %v326, 1
    %v328 = vadd.f32 %v326, %v327
    %329 = vset.pattern.permute.xlu0 7
    %330 = vperm.xlu0 %329, %v94
    %v331 = vpop.permute.xlu0 %330
    %v333 = vadd.f32 %v328, %v331
    %v334 = vadd.f32 %v276, %v333
    %v335 = vperm.slane %v98, 0
    %336 = vset.pattern.permute.xlu0 8
    %337 = vperm.xlu0 %336, %v79
    %v338 = vpop.permute.xlu0 %337
    %v340 = vmul.f32 %v335, %v338
    %341 = vset.pattern.permute.xlu0 8
    %342 = vperm.xlu0 %341, %v81
    %v343 = vpop.permute.xlu0 %342
    %v345 = vadd.f32 %v340, %v343
    %v346 = vtanh.pop %v345
    %347 = vset.pattern.permute.xlu0 8
    %348 = vperm.xlu0 %347, %v86
    %v349 = vpop.permute.xlu0 %348
    %v351 = vmul.f32 %v346, %v349
    %v352 = vrot.slane %v351, 4
    %v353 = vadd.f32 %v351, %v352
    %v354 = vrot.slane %v353, 2
    %v355 = vadd.f32 %v353, %v354
    %v356 = vrot.slane %v355, 1
    %v357 = vadd.f32 %v355, %v356
    %358 = vset.pattern.permute.xlu0 8
    %359 = vperm.xlu0 %358, %v94
    %v360 = vpop.permute.xlu0 %359
    %v362 = vadd.f32 %v357, %v360
    %v363 = vadd.f32 %v334, %v362
    %v364 = vperm.slane %v363, 0
    %365 = vset.pattern.permute.xlu0 9
    %366 = vperm.xlu0 %365, %v79
    %v367 = vpop.permute.xlu0 %366
    %v369 = vmul.f32 %v364, %v367
    %370 = vset.pattern.permute.xlu0 9
    %371 = vperm.xlu0 %370, %v81
    %v372 = vpop.permute.xlu0 %371
    %v374 = vadd.f32 %v369, %v372
    %v375 = vtanh.pop %v374
    %376 = vset.pattern.permute.xlu0 9
    %377 = vperm.xlu0 %376, %v86
    %v378 = vpop.permute.xlu0 %377
    %v380 = vmul.f32 %v375, %v378
    %v381 = vrot.slane %v380, 4
    %v382 = vadd.f32 %v380, %v381
    %v383 = vrot.slane %v382, 2
    %v384 = vadd.f32 %v382, %v383
    %v385 = vrot.slane %v384, 1
    %v386 = vadd.f32 %v384, %v385
    %387 = vset.pattern.permute.xlu0 9
    %388 = vperm.xlu0 %387, %v94
    %v389 = vpop.permute.xlu0 %388
    %v391 = vadd.f32 %v386, %v389
    %v392 = vadd.f32 %v98, %v391
    %v393 = vperm.slane %v392, 0
    %394 = vset.pattern.permute.xlu0 10
    %395 = vperm.xlu0 %394, %v79
    %v396 = vpop.permute.xlu0 %395
    %v398 = vmul.f32 %v393, %v396
    %399 = vset.pattern.permute.xlu0 10
    %400 = vperm.xlu0 %399, %v81
    %v401 = vpop.permute.xlu0 %400
    %v403 = vadd.f32 %v398, %v401
    %v404 = vtanh.pop %v403
    %405 = vset.pattern.permute.xlu0 10
    %406 = vperm.xlu0 %405, %v86
    %v407 = vpop.permute.xlu0 %406
    %v409 = vmul.f32 %v404, %v407
    %v410 = vrot.slane %v409, 4
    %v411 = vadd.f32 %v409, %v410
    %v412 = vrot.slane %v411, 2
    %v413 = vadd.f32 %v411, %v412
    %v414 = vrot.slane %v413, 1
    %v415 = vadd.f32 %v413, %v414
    %416 = vset.pattern.permute.xlu0 10
    %417 = vperm.xlu0 %416, %v94
    %v418 = vpop.permute.xlu0 %417
    %v420 = vadd.f32 %v415, %v418
    %v421 = vadd.f32 %v363, %v420
    %v422 = vperm.slane %v421, 0
    %423 = vset.pattern.permute.xlu0 11
    %424 = vperm.xlu0 %423, %v79
    %v425 = vpop.permute.xlu0 %424
    %v427 = vmul.f32 %v422, %v425
    %428 = vset.pattern.permute.xlu0 11
    %429 = vperm.xlu0 %428, %v81
    %v430 = vpop.permute.xlu0 %429
    %v432 = vadd.f32 %v427, %v430
    %v433 = vtanh.pop %v432
    %434 = vset.pattern.permute.xlu0 11
    %435 = vperm.xlu0 %434, %v86
    %v436 = vpop.permute.xlu0 %435
    %v438 = vmul.f32 %v433, %v436
    %v439 = vrot.slane %v438, 4
    %v440 = vadd.f32 %v438, %v439
    %v441 = vrot.slane %v440, 2
    %v442 = vadd.f32 %v440, %v441
    %v443 = vrot.slane %v442, 1
    %v444 = vadd.f32 %v442, %v443
    %445 = vset.pattern.permute.xlu0 11
    %446 = vperm.xlu0 %445, %v94
    %v447 = vpop.permute.xlu0 %446
    %v449 = vadd.f32 %v444, %v447
    %v450 = vadd.f32 %v392, %v449
    %451 = vst [vmem:[#allocation11] sm:$0x1] %v189
    %452 = vst [vmem:[#allocation11 + $0x1] sm:$0x1] %v305
    %453 = vst [vmem:[#allocation11 + $0x2] sm:$0x1] %v421
    %454 = vst [vmem:[#allocation11 + $0x3] sm:$0x1] %v450
    // Predicated region
    $region38: #{tpu_custom_call.1} parent=1 // pred_check
      _
    $region39: #{tpu_custom_call.1} parent=1 // pred_check_branch
      %456 = sbr.rel (0) target = $region41
    $region40: #{tpu_custom_call.1} parent=1 // pred_region
      %458 = vsyncadd [#allocation5], 0
      %s460 = sshll.u32 [#allocation11], 4
      %s461 = int_to_ptr.vmem [resolvable:$true] %s460
      %s462 = sshll.u32 %s5, 4
      %s463 = int_to_ptr.hbm [resolvable:$true] %s462
      %465 = dma.vmem_to_hbm [thread:$0]  %s461, 64, %s463, [#allocation5]
    $region41: #{tpu_custom_call.1} parent=1 // pred_fallthru
      _
    // Predicated region
    $region42: #{tpu_custom_call.1} parent=1 // pred_check
      _
    $region43: #{tpu_custom_call.1} parent=1 // pred_check_branch
      %467 = sbr.rel (0) target = $region45
    $region44: #{tpu_custom_call.1} parent=1 // pred_region
      %469 = dma.done [#allocation5], 64
    $region45: #{tpu_custom_call.1} parent=1 // pred_fallthru
      _
    %470 = vsyncpa [#allocation4], 1
    %471 = vsyncpa [#allocation7], 1
    %472 = vsyncpa [#allocation10], 1
    %473 = vsyncpa [#allocation5], 1

</llo_original>
